<compile_context>
chip_gen: v5e
topology: v5e:2x2
jax: 0.10.0
libtpu: 0.0.40
codegen_flags: <defaults>
</compile_context>

<pallas_src>
import jax
import jax.numpy as jnp
from jax.experimental import pallas as pl
from jax.experimental.pallas import tpu as pltpu


# ----------------------------- Pallas kernel ------------------------------- #

def _bottleneck_kernel(x_ref, w1_ref, w2_ref, w3_ref, b1_ref, b2_ref, b3_ref,
                       o_ref):
    # x_ref : (1, H, W, Cin)   bf16 -- whole image, resident across row tiles
    # w1    : (Cin, C1)        bf16 (BN1 scale folded in)
    # w2    : (3, 3*C1, C1)    bf16 (BN2 scale folded in, kx taps stacked on
    #                               the contraction axis)
    # w3    : (C1, Cout)       bf16 (BN3 scale folded in)
    # b*    : (1, C) f32 folded-BN biases
    # o_ref : (1, TH, W, Cout) bf16
    _, H, W, Cin = x_ref.shape
    _, TH, _, Cout = o_ref.shape
    C1 = w1_ref.shape[1]
    cdt = w1_ref.dtype                       # MXU compute dtype (bf16)
    f32 = jnp.float32

    r = pl.program_id(1)
    nr = pl.num_programs(1)
    row0 = pl.multiple_of(r * TH, TH)

    w1 = w1_ref[...]
    b1 = b1_ref[...]
    b2 = b2_ref[...]
    b3 = b3_ref[...]

    # ---- conv1 (1x1) + bn1 + relu on the TH-row tile ---------------------- #
    xt = x_ref[0, pl.ds(row0, TH), :, :]                   # (TH, W, Cin) bf16
    x2d = xt.reshape(TH * W, Cin)
    h = jnp.dot(x2d.astype(cdt), w1, preferred_element_type=f32)
    h = jnp.maximum(h + b1, 0.0)
    h_main = h.reshape(TH, W, C1).astype(cdt)

    # ---- conv1 on the 1-row halo above/below (one small combined dot) ----- #
    # (zeroed at the image boundary, matching conv2's zero padding of h)
    top = x_ref[0, pl.ds(jnp.maximum(row0 - 1, 0), 1), :, :].reshape(W, Cin)
    bot = x_ref[0, pl.ds(jnp.minimum(row0 + TH, H - 1), 1), :, :].reshape(W, Cin)
    xh = jnp.concatenate([top, bot], axis=0)               # (2W, Cin)
    hh = jnp.maximum(
        jnp.dot(xh.astype(cdt), w1, preferred_element_type=f32) + b1, 0.0)
    h_top = (hh[:W] * (r > 0).astype(f32)).reshape(1, W, C1).astype(cdt)
    h_bot = (hh[W:] * (r < nr - 1).astype(f32)).reshape(1, W, C1).astype(cdt)

    # h_ext holds image rows row0-1 .. row0+TH (zero outside the image)
    h_ext = jnp.concatenate([h_top, h_main, h_bot], axis=0)  # (TH+2, W, C1)

    # ---- conv2 (3x3, pad=1): 3 kx taps concatenated on contraction axis --- #
    zcol = jnp.zeros((TH + 2, 1, C1), cdt)
    tap_l = jnp.concatenate([zcol, h_ext[:, :W - 1, :]], axis=1)   # kx = 0
    tap_r = jnp.concatenate([h_ext[:, 1:, :], zcol], axis=1)       # kx = 2
    hcat = jnp.concatenate([tap_l, h_ext, tap_r], axis=-1)   # (TH+2, W, 3*C1)

    acc = None
    for ky in range(3):                       # ky row-slices are cheap (dim 0)
        a2 = hcat[ky:ky + TH].reshape(TH * W, 3 * C1)
        d = jnp.dot(a2, w2_ref[ky], preferred_element_type=f32)
        acc = d if acc is None else acc + d
    g = jnp.maximum(acc + b2, 0.0)                            # (TH*W, C1) f32

    # ---- conv3 (1x1) + bn3 + identity shortcut + relu --------------------- #
    y = jnp.dot(g.astype(cdt), w3_ref[...], preferred_element_type=f32)
    y = y + b3 + x2d.astype(f32)                              # residual in f32
    o_ref[...] = jnp.maximum(y, 0.0).reshape(1, TH, W, Cout).astype(o_ref.dtype)


# ------------------------------ wrappers ------------------------------------ #

def fold_bn(gamma, beta, mean, var, eps=1e-5):
    scale = gamma / jnp.sqrt(var + eps)
    bias = beta - mean * scale
    return scale, bias


def bottleneck_forward(x, params, *, row_tile=16, io_dtype=jnp.bfloat16,
                       compute_dtype=jnp.bfloat16):
    """x: (N, H, W, inplanes) NHWC.  stride=1, downsample=None (identity)."""
    N, H, W, Cin = x.shape
    (w1, s1, b1), (w2, s2, b2), (w3, s3, b3) = params
    C1 = w1.shape[1]
    Cout = w3.shape[1]
    assert w2.shape == (3, 3, C1, C1)
    assert Cin == Cout, "identity shortcut needs inplanes == planes*expansion"

    # largest row tile <= row_tile that divides H; guard the th==1 perf cliff.
    th = max(1, min(row_tile, H))
    while H % th:
        th -= 1
    if th < min(8, H) and th < H:
        # TODO(synk): a masked last tile would avoid whole-image tiles for
        #             large prime H; whole-image fallback is correct but big.
        th = H
    grid = (N, H // th)

    f32 = jnp.float32
    # Fold BN scales into the conv weights in f32, then cast to bf16; only the
    # bias adds and ReLUs remain in the kernel.
    w1f = (w1.astype(f32) * s1[None, :]).astype(compute_dtype)
    w2f = (w2.astype(f32) * s2[None, None, None, :]
           ).reshape(3, 3 * C1, C1).astype(compute_dtype)
    w3f = (w3.astype(f32) * s3[None, :]).astype(compute_dtype)

    args = (
        x.astype(io_dtype),
        w1f, w2f, w3f,
        b1.reshape(1, C1).astype(f32),
        b2.reshape(1, C1).astype(f32),
        b3.reshape(1, Cout).astype(f32),
    )
    in_specs = [
        # whole image resident in VMEM across the row-tile axis: x is DMA'd
        # from HBM once per image and intermediates never go back to HBM.
        pl.BlockSpec((1, H, W, Cin), lambda n, r: (n, 0, 0, 0)),
        pl.BlockSpec((Cin, C1), lambda n, r: (0, 0)),
        pl.BlockSpec((3, 3 * C1, C1), lambda n, r: (0, 0, 0)),
        pl.BlockSpec((C1, Cout), lambda n, r: (0, 0)),
        pl.BlockSpec((1, C1), lambda n, r: (0, 0)),
        pl.BlockSpec((1, C1), lambda n, r: (0, 0)),
        pl.BlockSpec((1, Cout), lambda n, r: (0, 0)),
    ]

    # Explicit VMEM budget (v5e 16 MiB / v7x 32 MiB scoped defaults, v7x only
    # 64 MiB physical): double-buffered x block + out tile + weights + values.
    isz = jnp.dtype(io_dtype).itemsize
    csz = jnp.dtype(compute_dtype).itemsize
    x_bytes = H * W * Cin * isz
    o_bytes = th * W * Cout * isz
    w_bytes = (Cin * C1 + 3 * 3 * C1 * C1 + C1 * Cout) * csz
    interm = (th + 2) * W * 3 * C1 * (csz + 4) + th * W * (C1 + Cout) * 8
    vmem_limit = int(min(max(2 * (x_bytes + o_bytes) + 2 * w_bytes + interm
                             + (8 << 20), 32 << 20), 64 << 20))

    return pl.pallas_call(
        _bottleneck_kernel,
        out_shape=jax.ShapeDtypeStruct((N, H, W, Cout), io_dtype),
        grid=grid,
        in_specs=in_specs,
        out_specs=pl.BlockSpec((1, th, W, Cout), lambda n, r: (n, r, 0, 0)),
        compiler_params=pltpu.CompilerParams(
            # both axes parallel: row tiles are independent (halo recomputed,
            # disjoint output tiles), so batch-1 fills both v7x TensorCores.
            dimension_semantics=("parallel", "parallel"),
            vmem_limit_bytes=vmem_limit),
    )(*args)


# --------------------------- pure-JAX references ---------------------------- #

def _ref_conv(x, w, pad=0):
    return jax.lax.conv_general_dilated(
        x, w, window_strides=(1, 1), padding=((pad, pad), (pad, pad)),
        dimension_numbers=("NHWC", "HWIO", "NHWC"),
        preferred_element_type=jnp.float32)


def bottleneck_ref(x, params):
    """Full-f32 module semantics: conv -> folded-BN affine -> relu (+identity)."""
    (w1, s1, b1), (w2, s2, b2), (w3, s3, b3) = params
    h = jnp.maximum(_ref_conv(x, w1[None, None]) * s1 + b1, 0.0)
    g = jnp.maximum(_ref_conv(h, w2, pad=1) * s2 + b2, 0.0)
    o = _ref_conv(g, w3[None, None]) * s3 + b3 + x
    return jnp.maximum(o, 0.0)


def bottleneck_ref_quantized(x, params, io_dtype=jnp.bfloat16,
                             cdt=jnp.bfloat16):
    """Reference mirroring the kernel arithmetic (bf16 operands, f32 acc)."""
    (w1, s1, b1), (w2, s2, b2), (w3, s3, b3) = params
    f32 = jnp.float32
    q = lambda a: a.astype(cdt).astype(f32)
    xq = x.astype(io_dtype).astype(f32)
    w1q = q(w1 * s1[None, :])
    w2q = q(w2 * s2[None, None, None, :])
    w3q = q(w3 * s3[None, :])
    h = jnp.maximum(_ref_conv(xq, w1q[None, None]) + b1, 0.0)
    g = jnp.maximum(_ref_conv(q(h), w2q, pad=1) + b2, 0.0)
    y = _ref_conv(q(g), w3q[None, None]) + b3 + xq
    return jnp.maximum(y, 0.0).astype(io_dtype)


# ----------------------------------- main ----------------------------------- #

if __name__ == "__main__":
    # Bottleneck(inplanes=16, planes=4): width = 4, out channels = planes*4 = 16,
    # so the identity shortcut is shape compatible (downsample=None, stride=1).
    inplanes, planes, expansion = 16, 4, 4
    width = int(planes * (64 / 64.0)) * 1
    out_ch = planes * expansion
    N, H, W = 2, 16, 16

    key = jax.random.PRNGKey(0)
    ks = jax.random.split(key, 7)

    x = jax.random.normal(ks[0], (N, H, W, inplanes), jnp.float32)

    def bn_params(k, c):
        k1, k2, k3, k4 = jax.random.split(k, 4)
        gamma = jax.random.uniform(k1, (c,), jnp.float32, 0.5, 1.5)
        beta = 0.1 * jax.random.normal(k2, (c,), jnp.float32)
        mean = 0.1 * jax.random.normal(k3, (c,), jnp.float32)
        var = jax.random.uniform(k4, (c,), jnp.float32, 0.5, 1.5)
        return fold_bn(gamma, beta, mean, var)

    w1 = 0.1 * jax.random.normal(ks[1], (inplanes, width), jnp.float32)
    s1, b1 = bn_params(ks[2], width)
    w2 = 0.1 * jax.random.normal(ks[3], (3, 3, width, width), jnp.float32)
    s2, b2 = bn_params(ks[4], width)
    w3 = 0.1 * jax.random.normal(ks[5], (width, out_ch), jnp.float32)
    s3, b3 = bn_params(ks[6], out_ch)

    params = ((w1, s1, b1), (w2, s2, b2), (w3, s3, b3))

    ref_q = bottleneck_ref_quantized(x, params).astype(jnp.float32)
    ref_f = bottleneck_ref(x, params)

    # multi-tile (exercises the conv1 halo path) and single-tile configurations
    for rt in (8, 16):
        out = jax.block_until_ready(bottleneck_forward(x, params, row_tile=rt))
        assert out.shape == (N, H, W, out_ch) and out.dtype == jnp.bfloat16
        o32 = out.astype(jnp.float32)
        # tight check vs a reference using the same bf16 operand quantization
        assert jnp.allclose(o32, ref_q, rtol=2e-2, atol=2e-2), \
            f"row_tile={rt}: max abs err vs bf16-quantized ref " \
            f"{jnp.max(jnp.abs(o32 - ref_q))}"
        # sanity check vs full-f32 module semantics (difference = bf16 rounding)
        assert jnp.allclose(o32, ref_f, rtol=1e-1, atol=1e-1), \
            f"row_tile={rt}: max abs err vs f32 ref " \
            f"{jnp.max(jnp.abs(o32 - ref_f))}"

    print("KERNEL_OK")
</pallas_src>

<mosaic_0001>
module attributes {stable_mosaic.version = 11 : i64} {
  func.func @_bottleneck_kernel(%arg0: i32, %arg1: i32, %arg2: memref<1x16x16x16xbf16, #tpu.memory_space<vmem>>, %arg3: memref<16x4xbf16, #tpu.memory_space<vmem>>, %arg4: memref<3x12x4xbf16, #tpu.memory_space<vmem>>, %arg5: memref<4x16xbf16, #tpu.memory_space<vmem>>, %arg6: memref<1x4xf32, #tpu.memory_space<vmem>>, %arg7: memref<1x4xf32, #tpu.memory_space<vmem>>, %arg8: memref<1x16xf32, #tpu.memory_space<vmem>>, %arg9: memref<1x8x16x16xbf16, #tpu.memory_space<vmem>>) attributes {dimension_semantics = [#tpu.dimension_semantics<parallel>, #tpu.dimension_semantics<parallel>], iteration_bounds = array<i64: 2, 2>, scalar_prefetch = 0 : i64, scratch_operands = 0 : i64, tpu.core_type = #tpu.core_type<tc>, window_params = [{transform_indices = @transform_0, window_bounds = array<i64: 1, 16, 16, 16>}, {pipeline_mode = #tpu.pipeline_mode<synchronous>, transform_indices = @transform_1, window_bounds = array<i64: 16, 4>}, {pipeline_mode = #tpu.pipeline_mode<synchronous>, transform_indices = @transform_2, window_bounds = array<i64: 3, 12, 4>}, {pipeline_mode = #tpu.pipeline_mode<synchronous>, transform_indices = @transform_3, window_bounds = array<i64: 4, 16>}, {pipeline_mode = #tpu.pipeline_mode<synchronous>, transform_indices = @transform_4, window_bounds = array<i64: 1, 4>}, {pipeline_mode = #tpu.pipeline_mode<synchronous>, transform_indices = @transform_5, window_bounds = array<i64: 1, 4>}, {pipeline_mode = #tpu.pipeline_mode<synchronous>, transform_indices = @transform_6, window_bounds = array<i64: 1, 16>}, {transform_indices = @transform_7, window_bounds = array<i64: 1, 8, 16, 16>}]} {
    %c8_i32 = arith.constant 8 : i32
    %0 = arith.muli %arg1, %c8_i32 : i32
    %1 = tpu.assume_multiple %0, 8 : i32
    %c0 = arith.constant 0 : index
    %c0_0 = arith.constant 0 : index
    %2 = vector.load %arg3[%c0, %c0_0] : memref<16x4xbf16, #tpu.memory_space<vmem>>, vector<16x4xbf16>
    %c0_1 = arith.constant 0 : index
    %c0_2 = arith.constant 0 : index
    %3 = vector.load %arg6[%c0_1, %c0_2] : memref<1x4xf32, #tpu.memory_space<vmem>>, vector<1x4xf32>
    %c0_3 = arith.constant 0 : index
    %c0_4 = arith.constant 0 : index
    %4 = vector.load %arg7[%c0_3, %c0_4] : memref<1x4xf32, #tpu.memory_space<vmem>>, vector<1x4xf32>
    %c0_5 = arith.constant 0 : index
    %c0_6 = arith.constant 0 : index
    %5 = vector.load %arg8[%c0_5, %c0_6] : memref<1x16xf32, #tpu.memory_space<vmem>>, vector<1x16xf32>
    %c0_7 = arith.constant 0 : index
    %6 = arith.index_cast %1 : i32 to index
    %c0_8 = arith.constant 0 : index
    %c0_9 = arith.constant 0 : index
    %7 = vector.load %arg2[%c0_7, %6, %c0_8, %c0_9] : memref<1x16x16x16xbf16, #tpu.memory_space<vmem>>, vector<1x8x16x16xbf16>
    %8 = vector.shape_cast %7 : vector<1x8x16x16xbf16> to vector<8x16x16xbf16>
    %9 = vector.shape_cast %8 : vector<8x16x16xbf16> to vector<128x16xbf16>
    %cst = arith.constant dense<0.000000e+00> : vector<128x4xf32>
    %10 = tpu.matmul %9, %2, %cst {dimension_numbers = #tpu.dot_dimension_numbers<[1], [0], [0], [1], [0, 0, 1, 1], [], []>} : vector<128x16xbf16>, vector<16x4xbf16>, vector<128x4xf32> -> vector<128x4xf32>
    %11 = vector.broadcast %3 : vector<1x4xf32> to vector<128x4xf32>
    %12 = arith.addf %10, %11 : vector<128x4xf32>
    %cst_10 = arith.constant 0.000000e+00 : f32
    %13 = vector.broadcast %cst_10 : f32 to vector<128x4xf32>
    %14 = arith.maximumf %12, %13 : vector<128x4xf32>
    %15 = vector.shape_cast %14 : vector<128x4xf32> to vector<8x16x4xf32>
    %16 = arith.truncf %15 : vector<8x16x4xf32> to vector<8x16x4xbf16>
    %c1_i32 = arith.constant 1 : i32
    %17 = arith.subi %1, %c1_i32 : i32
    %c0_i32 = arith.constant 0 : i32
    %18 = arith.maxsi %17, %c0_i32 : i32
    %c0_11 = arith.constant 0 : index
    %19 = arith.index_cast %18 : i32 to index
    %c0_12 = arith.constant 0 : index
    %c0_13 = arith.constant 0 : index
    %20 = vector.load %arg2[%c0_11, %19, %c0_12, %c0_13] : memref<1x16x16x16xbf16, #tpu.memory_space<vmem>>, vector<1x1x16x16xbf16>
    %21 = vector.shape_cast %20 : vector<1x1x16x16xbf16> to vector<1x16x16xbf16>
    %22 = vector.shape_cast %21 : vector<1x16x16xbf16> to vector<16x16xbf16>
    %c8_i32_14 = arith.constant 8 : i32
    %23 = arith.addi %1, %c8_i32_14 : i32
    %c15_i32 = arith.constant 15 : i32
    %24 = arith.minsi %23, %c15_i32 : i32
    %c0_15 = arith.constant 0 : index
    %25 = arith.index_cast %24 : i32 to index
    %c0_16 = arith.constant 0 : index
    %c0_17 = arith.constant 0 : index
    %26 = vector.load %arg2[%c0_15, %25, %c0_16, %c0_17] : memref<1x16x16x16xbf16, #tpu.memory_space<vmem>>, vector<1x1x16x16xbf16>
    %27 = vector.shape_cast %26 : vector<1x1x16x16xbf16> to vector<1x16x16xbf16>
    %28 = vector.shape_cast %27 : vector<1x16x16xbf16> to vector<16x16xbf16>
    %29 = tpu.concatenate %22, %28 in 0 : vector<16x16xbf16>, vector<16x16xbf16> -> vector<32x16xbf16>
    %cst_18 = arith.constant dense<0.000000e+00> : vector<32x4xf32>
    %30 = tpu.matmul %29, %2, %cst_18 {dimension_numbers = #tpu.dot_dimension_numbers<[1], [0], [0], [1], [0, 0, 1, 1], [], []>} : vector<32x16xbf16>, vector<16x4xbf16>, vector<32x4xf32> -> vector<32x4xf32>
    %31 = vector.broadcast %3 : vector<1x4xf32> to vector<32x4xf32>
    %32 = arith.addf %30, %31 : vector<32x4xf32>
    %cst_19 = arith.constant 0.000000e+00 : f32
    %33 = vector.broadcast %cst_19 : f32 to vector<32x4xf32>
    %34 = arith.maximumf %32, %33 : vector<32x4xf32>
    %35 = vector.extract_strided_slice %34 {offsets = [0, 0], sizes = [16, 4], strides = [1, 1]} : vector<32x4xf32> to vector<16x4xf32>
    %c0_i32_20 = arith.constant 0 : i32
    %36 = arith.cmpi sgt, %arg1, %c0_i32_20 : i32
    %37 = arith.extui %36 : i1 to i32
    %38 = arith.sitofp %37 : i32 to f32
    %39 = vector.broadcast %38 : f32 to vector<16x4xf32>
    %40 = arith.mulf %35, %39 : vector<16x4xf32>
    %41 = vector.shape_cast %40 : vector<16x4xf32> to vector<1x16x4xf32>
    %42 = arith.truncf %41 : vector<1x16x4xf32> to vector<1x16x4xbf16>
    %43 = vector.extract_strided_slice %34 {offsets = [16, 0], sizes = [16, 4], strides = [1, 1]} : vector<32x4xf32> to vector<16x4xf32>
    %c1_i32_21 = arith.constant 1 : i32
    %44 = arith.cmpi slt, %arg1, %c1_i32_21 : i32
    %45 = arith.extui %44 : i1 to i32
    %46 = arith.sitofp %45 : i32 to f32
    %47 = vector.broadcast %46 : f32 to vector<16x4xf32>
    %48 = arith.mulf %43, %47 : vector<16x4xf32>
    %49 = vector.shape_cast %48 : vector<16x4xf32> to vector<1x16x4xf32>
    %50 = arith.truncf %49 : vector<1x16x4xf32> to vector<1x16x4xbf16>
    %51 = tpu.concatenate %42, %16, %50 in 0 : vector<1x16x4xbf16>, vector<8x16x4xbf16>, vector<1x16x4xbf16> -> vector<10x16x4xbf16>
    %cst_22 = arith.constant 0.000000e+00 : bf16
    %52 = vector.broadcast %cst_22 : bf16 to vector<10x1x4xbf16>
    %53 = vector.extract_strided_slice %51 {offsets = [0, 0, 0], sizes = [10, 15, 4], strides = [1, 1, 1]} : vector<10x16x4xbf16> to vector<10x15x4xbf16>
    %54 = tpu.concatenate %52, %53 in 1 : vector<10x1x4xbf16>, vector<10x15x4xbf16> -> vector<10x16x4xbf16>
    %55 = vector.extract_strided_slice %51 {offsets = [0, 1, 0], sizes = [10, 15, 4], strides = [1, 1, 1]} : vector<10x16x4xbf16> to vector<10x15x4xbf16>
    %56 = tpu.concatenate %55, %52 in 1 : vector<10x15x4xbf16>, vector<10x1x4xbf16> -> vector<10x16x4xbf16>
    %57 = tpu.concatenate %54, %51, %56 in 2 : vector<10x16x4xbf16>, vector<10x16x4xbf16>, vector<10x16x4xbf16> -> vector<10x16x12xbf16>
    %58 = vector.extract_strided_slice %57 {offsets = [0, 0, 0], sizes = [8, 16, 12], strides = [1, 1, 1]} : vector<10x16x12xbf16> to vector<8x16x12xbf16>
    %59 = vector.shape_cast %58 : vector<8x16x12xbf16> to vector<128x12xbf16>
    %c0_23 = arith.constant 0 : index
    %c0_24 = arith.constant 0 : index
    %c0_25 = arith.constant 0 : index
    %60 = vector.load %arg4[%c0_23, %c0_24, %c0_25] : memref<3x12x4xbf16, #tpu.memory_space<vmem>>, vector<1x12x4xbf16>
    %61 = vector.shape_cast %60 : vector<1x12x4xbf16> to vector<12x4xbf16>
    %cst_26 = arith.constant dense<0.000000e+00> : vector<128x4xf32>
    %62 = tpu.matmul %59, %61, %cst_26 {dimension_numbers = #tpu.dot_dimension_numbers<[1], [0], [0], [1], [0, 0, 1, 1], [], []>} : vector<128x12xbf16>, vector<12x4xbf16>, vector<128x4xf32> -> vector<128x4xf32>
    %63 = vector.extract_strided_slice %57 {offsets = [1, 0, 0], sizes = [8, 16, 12], strides = [1, 1, 1]} : vector<10x16x12xbf16> to vector<8x16x12xbf16>
    %64 = vector.shape_cast %63 : vector<8x16x12xbf16> to vector<128x12xbf16>
    %c1 = arith.constant 1 : index
    %c0_27 = arith.constant 0 : index
    %c0_28 = arith.constant 0 : index
    %65 = vector.load %arg4[%c1, %c0_27, %c0_28] : memref<3x12x4xbf16, #tpu.memory_space<vmem>>, vector<1x12x4xbf16>
    %66 = vector.shape_cast %65 : vector<1x12x4xbf16> to vector<12x4xbf16>
    %cst_29 = arith.constant dense<0.000000e+00> : vector<128x4xf32>
    %67 = tpu.matmul %64, %66, %cst_29 {dimension_numbers = #tpu.dot_dimension_numbers<[1], [0], [0], [1], [0, 0, 1, 1], [], []>} : vector<128x12xbf16>, vector<12x4xbf16>, vector<128x4xf32> -> vector<128x4xf32>
    %68 = arith.addf %62, %67 : vector<128x4xf32>
    %69 = vector.extract_strided_slice %57 {offsets = [2, 0, 0], sizes = [8, 16, 12], strides = [1, 1, 1]} : vector<10x16x12xbf16> to vector<8x16x12xbf16>
    %70 = vector.shape_cast %69 : vector<8x16x12xbf16> to vector<128x12xbf16>
    %c2 = arith.constant 2 : index
    %c0_30 = arith.constant 0 : index
    %c0_31 = arith.constant 0 : index
    %71 = vector.load %arg4[%c2, %c0_30, %c0_31] : memref<3x12x4xbf16, #tpu.memory_space<vmem>>, vector<1x12x4xbf16>
    %72 = vector.shape_cast %71 : vector<1x12x4xbf16> to vector<12x4xbf16>
    %cst_32 = arith.constant dense<0.000000e+00> : vector<128x4xf32>
    %73 = tpu.matmul %70, %72, %cst_32 {dimension_numbers = #tpu.dot_dimension_numbers<[1], [0], [0], [1], [0, 0, 1, 1], [], []>} : vector<128x12xbf16>, vector<12x4xbf16>, vector<128x4xf32> -> vector<128x4xf32>
    %74 = arith.addf %68, %73 : vector<128x4xf32>
    %75 = vector.broadcast %4 : vector<1x4xf32> to vector<128x4xf32>
    %76 = arith.addf %74, %75 : vector<128x4xf32>
    %cst_33 = arith.constant 0.000000e+00 : f32
    %77 = vector.broadcast %cst_33 : f32 to vector<128x4xf32>
    %78 = arith.maximumf %76, %77 : vector<128x4xf32>
    %79 = arith.truncf %78 : vector<128x4xf32> to vector<128x4xbf16>
    %c0_34 = arith.constant 0 : index
    %c0_35 = arith.constant 0 : index
    %80 = vector.load %arg5[%c0_34, %c0_35] : memref<4x16xbf16, #tpu.memory_space<vmem>>, vector<4x16xbf16>
    %cst_36 = arith.constant dense<0.000000e+00> : vector<128x16xf32>
    %81 = tpu.matmul %79, %80, %cst_36 {dimension_numbers = #tpu.dot_dimension_numbers<[1], [0], [0], [1], [0, 0, 1, 1], [], []>} : vector<128x4xbf16>, vector<4x16xbf16>, vector<128x16xf32> -> vector<128x16xf32>
    %82 = vector.broadcast %5 : vector<1x16xf32> to vector<128x16xf32>
    %83 = arith.addf %81, %82 : vector<128x16xf32>
    %84 = arith.extf %9 : vector<128x16xbf16> to vector<128x16xf32>
    %85 = arith.addf %83, %84 : vector<128x16xf32>
    %cst_37 = arith.constant 0.000000e+00 : f32
    %86 = vector.broadcast %cst_37 : f32 to vector<128x16xf32>
    %87 = arith.maximumf %85, %86 : vector<128x16xf32>
    %88 = vector.shape_cast %87 : vector<128x16xf32> to vector<1x8x16x16xf32>
    %89 = arith.truncf %88 : vector<1x8x16x16xf32> to vector<1x8x16x16xbf16>
    %c0_38 = arith.constant 0 : index
    %c0_39 = arith.constant 0 : index
    %c0_40 = arith.constant 0 : index
    %c0_41 = arith.constant 0 : index
    %90 = vector.load %arg9[%c0_38, %c0_39, %c0_40, %c0_41] : memref<1x8x16x16xbf16, #tpu.memory_space<vmem>>, vector<1x8x16x16xbf16>
    tpu.vector_store %arg9[%c0_38, %c0_39, %c0_40, %c0_41], %89 {strides = array<i32>} : memref<1x8x16x16xbf16, #tpu.memory_space<vmem>>, vector<1x8x16x16xbf16>,
    return
  }
  func.func @transform_0(%arg0: i32, %arg1: i32) -> (i32, i32, i32, i32) {
    %c0_i32 = arith.constant 0 : i32
    %c0_i32_0 = arith.constant 0 : i32
    %c0_i32_1 = arith.constant 0 : i32
    %c0_i32_2 = arith.constant 0 : i32
    return %arg0, %c0_i32, %c0_i32_0, %c0_i32_1 : i32, i32, i32, i32
  }
  func.func @transform_1(%arg0: i32, %arg1: i32) -> (i32, i32) {
    %c0_i32 = arith.constant 0 : i32
    %c0_i32_0 = arith.constant 0 : i32
    %c0_i32_1 = arith.constant 0 : i32
    return %c0_i32, %c0_i32_0 : i32, i32
  }
  func.func @transform_2(%arg0: i32, %arg1: i32) -> (i32, i32, i32) {
    %c0_i32 = arith.constant 0 : i32
    %c0_i32_0 = arith.constant 0 : i32
    %c0_i32_1 = arith.constant 0 : i32
    %c0_i32_2 = arith.constant 0 : i32
    return %c0_i32, %c0_i32_0, %c0_i32_1 : i32, i32, i32
  }
  func.func @transform_3(%arg0: i32, %arg1: i32) -> (i32, i32) {
    %c0_i32 = arith.constant 0 : i32
    %c0_i32_0 = arith.constant 0 : i32
    %c0_i32_1 = arith.constant 0 : i32
    return %c0_i32, %c0_i32_0 : i32, i32
  }
  func.func @transform_4(%arg0: i32, %arg1: i32) -> (i32, i32) {
    %c0_i32 = arith.constant 0 : i32
    %c0_i32_0 = arith.constant 0 : i32
    %c0_i32_1 = arith.constant 0 : i32
    return %c0_i32, %c0_i32_0 : i32, i32
  }
  func.func @transform_5(%arg0: i32, %arg1: i32) -> (i32, i32) {
    %c0_i32 = arith.constant 0 : i32
    %c0_i32_0 = arith.constant 0 : i32
    %c0_i32_1 = arith.constant 0 : i32
    return %c0_i32, %c0_i32_0 : i32, i32
  }
  func.func @transform_6(%arg0: i32, %arg1: i32) -> (i32, i32) {
    %c0_i32 = arith.constant 0 : i32
    %c0_i32_0 = arith.constant 0 : i32
    %c0_i32_1 = arith.constant 0 : i32
    return %c0_i32, %c0_i32_0 : i32, i32
  }
  func.func @transform_7(%arg0: i32, %arg1: i32) -> (i32, i32, i32, i32) {
    %c0_i32 = arith.constant 0 : i32
    %c0_i32_0 = arith.constant 0 : i32
    %c0_i32_1 = arith.constant 0 : i32
    return %arg0, %arg1, %c0_i32, %c0_i32_0 : i32, i32, i32, i32
  }
}

</mosaic_0001>

<llo_original>
// kernel: tpu_custom_call.1
$region0: #{tpu_custom_call.1}
  #allocation0 [shape = 'u32[]', space=smem, size = 0x4, offset = 0x4, fixed_abs, tag = 'smem constant byte address 0x4 - core index']
  #allocation1 [shape = 'u32[72,128]{1,0:T(1,128)}', space=vmem, size = 0x9000, scoped, tag = 'internal scratch']
  %s0 = inlined_call_operand.hbm [shape: bf16[2,16,16,16], index: 0, kind: input, shape index: {}]
  %s1 = inlined_call_operand.vmem [shape: bf16[16,4], index: 1, kind: input, shape index: {}]
  %s2 = inlined_call_operand.vmem [shape: bf16[3,12,4], index: 2, kind: input, shape index: {}]
  %s3 = inlined_call_operand.vmem [shape: bf16[4,16], index: 3, kind: input, shape index: {}]
  %s4 = inlined_call_operand.vmem [shape: f32[1,4], index: 4, kind: input, shape index: {}]
  %s5 = inlined_call_operand.vmem [shape: f32[1,4], index: 5, kind: input, shape index: {}]
  %s6 = inlined_call_operand.vmem [shape: f32[1,16], index: 6, kind: input, shape index: {}]
  %s7 = inlined_call_operand.hbm [shape: bf16[2,16,16,16], index: 7, kind: output, shape index: {}]
  %s8 = sld [smem:[#allocation0]]
  $region65: #{tpu_custom_call.1} parent=0
    _
  %s10 = ssub.s32 1, %s8
  %s11 = scalar_select 0, %s10, %s8
  $region1: #{tpu_custom_call.1} parent=0
    #allocation2 [shape = 'u8[131072]{0}', space=vmem, size = 0x20000, scoped, tag = 'input window, operand 0']
    #allocation3 [shape = 's32[2]{0}', space=sflag, size = 0x8, scoped, tag = 'scoped memory for tpu_custom_call.1']
    #allocation4 [shape = 's32[2]{0}', space=sflag, size = 0x8, scoped, tag = 'scoped memory for tpu_custom_call.1']
    #allocation5 [shape = 'u8[65536]{0}', space=vmem, size = 0x10000, scoped, tag = 'output window, operand 0']
    %12 = vsyncpa [#allocation3], 0
    %s13 = scalar_lea.sflag [#allocation3], 1
    %14 = vsyncpa %s13, 0
    %15 = vsyncpa [#allocation4], 0
    %s16 = scalar_lea.sflag [#allocation4], 1
    %17 = vsyncpa %s16, 0
    loop: start=0, step=1, limit=6
    $region2: #{tpu_custom_call.1} parent=1 // loop_pre_header
      _
    $region3: #{tpu_custom_call.1} parent=1 // loop_header
      %s19 = sphi 0, %s23
      %p20 = scmp.ge.s32.totalorder %s19, 6
      %s26 = sphi 0, %s38
      %s27 = sphi 0, %s34
      %s28 = sphi 0, %s26
      %s29 = sphi 0, %s27
      %s30 = sphi 0, %s28
      %s31 = sphi 0, %s29
      %s41 = sphi 0, %s43
      %s44 = sphi 0, %s41
      %s45 = sphi 0, %s44
      %s61 = sphi 0, %s45
      %s65 = sphi 0, %s65
      %s67 = sphi 0, %s65
      %s68 = sphi 0, %s67
      %s82 = sphi 0, %s68
      %s86 = sphi 0, %s86
      %s88 = sphi 0, %s86
      %s89 = sphi 0, %s88
      %s103 = sphi 0, %s89
      %s107 = sphi 0, %s107
      %s109 = sphi 0, %s107
      %s110 = sphi 0, %s109
      %s124 = sphi 0, %s110
      %s128 = sphi 0, %s128
      %s130 = sphi 0, %s128
      %s131 = sphi 0, %s130
      %s145 = sphi 0, %s131
      %s149 = sphi 0, %s149
      %s151 = sphi 0, %s149
      %s152 = sphi 0, %s151
      %s166 = sphi 0, %s152
      %s170 = sphi 0, %s170
      %s172 = sphi 0, %s170
      %s173 = sphi 0, %s172
      %s187 = sphi 0, %s173
      %s195 = sphi 0, %s197
      %s198 = sphi 0, %s195
      %s199 = sphi 0, %s198
      %s215 = sphi 0, %s199
    $region4: #{tpu_custom_call.1} parent=1 // loop_header_branch
      %22 = sbr.rel (%p20) target = $region8
    $region5: #{tpu_custom_call.1} parent=1 // loop_body
      %s24 = ssub.s32 %s19, 1
      %s25 = ssub.s32 %s19, 2
      %s32 = sadd.s32 1, %s27
      %p33 = scmp.ge.s32.totalorder %s32, 2
      %s34 = scalar_select %p33, 0, %s32
      %s35 = sadd.s32 1, %s26
      %s36 = scalar_select %p33, %s35, %s26
      %p37 = scmp.ge.s32.totalorder %s36, 2
      %s38 = scalar_select %p37, 0, %s36
      %s39 = ssub.s32 %s26, %s38
      %p40 = scmp.eq.s32.totalorder %s39, 0
      %s42 = sadd.s32 %s41, 1
      %s43 = scalar_select %p40, %s41, %s42
      %p46 = pneg %p40
      %p47 = scmp.eq.s32.totalorder %s19, 3
      %p48 = por %p46, %p47
      %p49 = scmp.ne.s32.totalorder %s41, %s44
      %p50 = scmp.eq.s32.totalorder %s19, 0
      %p51 = por %p49, %p50
      %p52 = scmp.ne.s32.totalorder %s41, %s44
      %p53 = scmp.eq.s32.totalorder %s24, 3
      %p54 = por %p52, %p53
      %p55 = scmp.ne.s32.totalorder %s44, %s45
      %p56 = scmp.eq.s32.totalorder %s24, 0
      %p57 = por %p55, %p56
      %p58 = scmp.ne.s32.totalorder %s44, %s45
      %p59 = scmp.eq.s32.totalorder %s25, 3
      %p60 = por %p58, %p59
      %p62 = scmp.ne.s32.totalorder %s45, %s61
      %p63 = scmp.eq.s32.totalorder %s25, 0
      %p64 = por %p62, %p63
      %s66 = sadd.s32 %s65, 1
      %p69 = scmp.eq.s32.totalorder %s19, 3
      %p70 = scmp.ne.s32.totalorder %s65, %s67
      %p71 = scmp.eq.s32.totalorder %s19, 0
      %p72 = por %p70, %p71
      %p73 = scmp.ne.s32.totalorder %s65, %s67
      %p74 = scmp.eq.s32.totalorder %s24, 3
      %p75 = por %p73, %p74
      %p76 = scmp.ne.s32.totalorder %s67, %s68
      %p77 = scmp.eq.s32.totalorder %s24, 0
      %p78 = por %p76, %p77
      %p79 = scmp.ne.s32.totalorder %s67, %s68
      %p80 = scmp.eq.s32.totalorder %s25, 3
      %p81 = por %p79, %p80
      %p83 = scmp.ne.s32.totalorder %s68, %s82
      %p84 = scmp.eq.s32.totalorder %s25, 0
      %p85 = por %p83, %p84
      %s87 = sadd.s32 %s86, 1
      %p90 = scmp.eq.s32.totalorder %s19, 3
      %p91 = scmp.ne.s32.totalorder %s86, %s88
      %p92 = scmp.eq.s32.totalorder %s19, 0
      %p93 = por %p91, %p92
      %p94 = scmp.ne.s32.totalorder %s86, %s88
      %p95 = scmp.eq.s32.totalorder %s24, 3
      %p96 = por %p94, %p95
      %p97 = scmp.ne.s32.totalorder %s88, %s89
      %p98 = scmp.eq.s32.totalorder %s24, 0
      %p99 = por %p97, %p98
      %p100 = scmp.ne.s32.totalorder %s88, %s89
      %p101 = scmp.eq.s32.totalorder %s25, 3
      %p102 = por %p100, %p101
      %p104 = scmp.ne.s32.totalorder %s89, %s103
      %p105 = scmp.eq.s32.totalorder %s25, 0
      %p106 = por %p104, %p105
      %s108 = sadd.s32 %s107, 1
      %p111 = scmp.eq.s32.totalorder %s19, 3
      %p112 = scmp.ne.s32.totalorder %s107, %s109
      %p113 = scmp.eq.s32.totalorder %s19, 0
      %p114 = por %p112, %p113
      %p115 = scmp.ne.s32.totalorder %s107, %s109
      %p116 = scmp.eq.s32.totalorder %s24, 3
      %p117 = por %p115, %p116
      %p118 = scmp.ne.s32.totalorder %s109, %s110
      %p119 = scmp.eq.s32.totalorder %s24, 0
      %p120 = por %p118, %p119
      %p121 = scmp.ne.s32.totalorder %s109, %s110
      %p122 = scmp.eq.s32.totalorder %s25, 3
      %p123 = por %p121, %p122
      %p125 = scmp.ne.s32.totalorder %s110, %s124
      %p126 = scmp.eq.s32.totalorder %s25, 0
      %p127 = por %p125, %p126
      %s129 = sadd.s32 %s128, 1
      %p132 = scmp.eq.s32.totalorder %s19, 3
      %p133 = scmp.ne.s32.totalorder %s128, %s130
      %p134 = scmp.eq.s32.totalorder %s19, 0
      %p135 = por %p133, %p134
      %p136 = scmp.ne.s32.totalorder %s128, %s130
      %p137 = scmp.eq.s32.totalorder %s24, 3
      %p138 = por %p136, %p137
      %p139 = scmp.ne.s32.totalorder %s130, %s131
      %p140 = scmp.eq.s32.totalorder %s24, 0
      %p141 = por %p139, %p140
      %p142 = scmp.ne.s32.totalorder %s130, %s131
      %p143 = scmp.eq.s32.totalorder %s25, 3
      %p144 = por %p142, %p143
      %p146 = scmp.ne.s32.totalorder %s131, %s145
      %p147 = scmp.eq.s32.totalorder %s25, 0
      %p148 = por %p146, %p147
      %s150 = sadd.s32 %s149, 1
      %p153 = scmp.eq.s32.totalorder %s19, 3
      %p154 = scmp.ne.s32.totalorder %s149, %s151
      %p155 = scmp.eq.s32.totalorder %s19, 0
      %p156 = por %p154, %p155
      %p157 = scmp.ne.s32.totalorder %s149, %s151
      %p158 = scmp.eq.s32.totalorder %s24, 3
      %p159 = por %p157, %p158
      %p160 = scmp.ne.s32.totalorder %s151, %s152
      %p161 = scmp.eq.s32.totalorder %s24, 0
      %p162 = por %p160, %p161
      %p163 = scmp.ne.s32.totalorder %s151, %s152
      %p164 = scmp.eq.s32.totalorder %s25, 3
      %p165 = por %p163, %p164
      %p167 = scmp.ne.s32.totalorder %s152, %s166
      %p168 = scmp.eq.s32.totalorder %s25, 0
      %p169 = por %p167, %p168
      %s171 = sadd.s32 %s170, 1
      %p174 = scmp.eq.s32.totalorder %s19, 3
      %p175 = scmp.ne.s32.totalorder %s170, %s172
      %p176 = scmp.eq.s32.totalorder %s19, 0
      %p177 = por %p175, %p176
      %p178 = scmp.ne.s32.totalorder %s170, %s172
      %p179 = scmp.eq.s32.totalorder %s24, 3
      %p180 = por %p178, %p179
      %p181 = scmp.ne.s32.totalorder %s172, %s173
      %p182 = scmp.eq.s32.totalorder %s24, 0
      %p183 = por %p181, %p182
      %p184 = scmp.ne.s32.totalorder %s172, %s173
      %p185 = scmp.eq.s32.totalorder %s25, 3
      %p186 = por %p184, %p185
      %p188 = scmp.ne.s32.totalorder %s173, %s187
      %p189 = scmp.eq.s32.totalorder %s25, 0
      %p190 = por %p188, %p189
      %s191 = ssub.s32 %s26, %s38
      %s192 = ssub.s32 %s27, %s34
      %s193 = sor.u32 %s191, %s192
      %p194 = scmp.eq.s32.totalorder %s193, 0
      %s196 = sadd.s32 %s195, 1
      %s197 = scalar_select %p194, %s195, %s196
      %p200 = pneg %p194
      %p201 = scmp.eq.s32.totalorder %s19, 3
      %p202 = por %p200, %p201
      %p203 = scmp.ne.s32.totalorder %s195, %s198
      %p204 = scmp.eq.s32.totalorder %s19, 0
      %p205 = por %p203, %p204
      %p206 = scmp.ne.s32.totalorder %s195, %s198
      %p207 = scmp.eq.s32.totalorder %s24, 3
      %p208 = por %p206, %p207
      %p209 = scmp.ne.s32.totalorder %s198, %s199
      %p210 = scmp.eq.s32.totalorder %s24, 0
      %p211 = por %p209, %p210
      %p212 = scmp.ne.s32.totalorder %s198, %s199
      %p213 = scmp.eq.s32.totalorder %s25, 3
      %p214 = por %p212, %p213
      %p216 = scmp.ne.s32.totalorder %s199, %s215
      %p217 = scmp.eq.s32.totalorder %s25, 0
      %p218 = por %p216, %p217
      %p219 = scmp.le.s32.totalorder 1, %s19
      %p220 = scmp.lt.s32.totalorder %s19, 5
      %p221 = pnand %p219, %p220
      %p222 = pneg %p221
      // Predicated region
      $region9: #{tpu_custom_call.1} parent=5 // pred_check
        _
      $region10: #{tpu_custom_call.1} parent=5 // pred_check_branch
        %224 = sbr.rel (%p221) target = $region12
      $region11: #{tpu_custom_call.1} parent=5 // pred_region
        %s225 = ssub.s32 %s19, 1
        // Predicated region
        $region13: #{tpu_custom_call.1} parent=11 // pred_check
          %p226 = pneg %p78
        $region14: #{tpu_custom_call.1} parent=11 // pred_check_branch
          %228 = sbr.rel (%p226) target = $region16
        $region15: #{tpu_custom_call.1} parent=11 // pred_region
          _
        $region16: #{tpu_custom_call.1} parent=11 // pred_fallthru
          _
        // Predicated region
        $region17: #{tpu_custom_call.1} parent=11 // pred_check
          %p229 = pneg %p99
        $region18: #{tpu_custom_call.1} parent=11 // pred_check_branch
          %231 = sbr.rel (%p229) target = $region20
        $region19: #{tpu_custom_call.1} parent=11 // pred_region
          _
        $region20: #{tpu_custom_call.1} parent=11 // pred_fallthru
          _
        // Predicated region
        $region21: #{tpu_custom_call.1} parent=11 // pred_check
          %p232 = pneg %p120
        $region22: #{tpu_custom_call.1} parent=11 // pred_check_branch
          %234 = sbr.rel (%p232) target = $region24
        $region23: #{tpu_custom_call.1} parent=11 // pred_region
          _
        $region24: #{tpu_custom_call.1} parent=11 // pred_fallthru
          _
        // Predicated region
        $region25: #{tpu_custom_call.1} parent=11 // pred_check
          %p235 = pneg %p141
        $region26: #{tpu_custom_call.1} parent=11 // pred_check_branch
          %237 = sbr.rel (%p235) target = $region28
        $region27: #{tpu_custom_call.1} parent=11 // pred_region
          _
        $region28: #{tpu_custom_call.1} parent=11 // pred_fallthru
          _
        // Predicated region
        $region29: #{tpu_custom_call.1} parent=11 // pred_check
          %p238 = pneg %p162
        $region30: #{tpu_custom_call.1} parent=11 // pred_check_branch
          %240 = sbr.rel (%p238) target = $region32
        $region31: #{tpu_custom_call.1} parent=11 // pred_region
          _
        $region32: #{tpu_custom_call.1} parent=11 // pred_fallthru
          _
        // Predicated region
        $region33: #{tpu_custom_call.1} parent=11 // pred_check
          %p241 = pneg %p183
        $region34: #{tpu_custom_call.1} parent=11 // pred_check_branch
          %243 = sbr.rel (%p241) target = $region36
        $region35: #{tpu_custom_call.1} parent=11 // pred_region
          _
        $region36: #{tpu_custom_call.1} parent=11 // pred_fallthru
          _
      $region12: #{tpu_custom_call.1} parent=5 // pred_fallthru
        _
      %p244 = scmp.lt.s32.totalorder %s19, 4
      // Predicated region
      $region37: #{tpu_custom_call.1} parent=5 // pred_check
        %p245 = pneg %p244
      $region38: #{tpu_custom_call.1} parent=5 // pred_check_branch
        %247 = sbr.rel (%p245) target = $region40
      $region39: #{tpu_custom_call.1} parent=5 // pred_region
        // Predicated region
        $region41: #{tpu_custom_call.1} parent=39 // pred_check
          %p248 = pneg %p51
        $region42: #{tpu_custom_call.1} parent=39 // pred_check_branch
          %250 = sbr.rel (%p248) target = $region44
        $region43: #{tpu_custom_call.1} parent=39 // pred_region
          %s251 = sand.u32 %s41, 1
          %s252 = scalar_lea.sflag [#allocation3], %s251
          %s253 = sand.u32 %s41, 1
          %s254 = smul.addr %s253, 128
          %s255 = scalar_lea.vmem [#allocation2], %s254
          %257 = vsyncadd %s252, 0
          %s258 = smul.addr %s26, 32
          %s259 = smul.addr %s258, 4
          %s260 = scalar_lea.hbm %s0, %s259
          %s261 = sshll.u32 %s260, 4
          %s262 = int_to_ptr.hbm [resolvable:$true] %s261
          %s263 = sshll.u32 %s255, 4
          %s264 = int_to_ptr.vmem [resolvable:$true] %s263
          %269 = dma.hbm_to_vmem [thread:$0]  %s262, 2048, %s264, %s252, 64, 64, 4
        $region44: #{tpu_custom_call.1} parent=39 // pred_fallthru
          _
      $region40: #{tpu_custom_call.1} parent=5 // pred_fallthru
        _
      %p270 = scmp.le.s32.totalorder 1, %s19
      %p271 = scmp.lt.s32.totalorder %s19, 5
      %p272 = pnand %p270, %p271
      %p273 = pneg %p272
      // Predicated region
      $region45: #{tpu_custom_call.1} parent=5 // pred_check
        _
      $region46: #{tpu_custom_call.1} parent=5 // pred_check_branch
        %275 = sbr.rel (%p272) target = $region48
      $region47: #{tpu_custom_call.1} parent=5 // pred_region
        %s276 = ssub.s32 %s19, 1
        %s277 = sand.u32 %s44, 1
        %s278 = scalar_lea.sflag [#allocation3], %s277
        %s279 = sand.u32 %s44, 1
        %s280 = smul.addr %s279, 128
        %s281 = scalar_lea.vmem [#allocation2], %s280
        // Predicated region
        $region49: #{tpu_custom_call.1} parent=47 // pred_check
          %p282 = pneg %p57
        $region50: #{tpu_custom_call.1} parent=47 // pred_check_branch
          %284 = sbr.rel (%p282) target = $region52
        $region51: #{tpu_custom_call.1} parent=47 // pred_region
          %286 = dma.done %s278, 2048
        $region52: #{tpu_custom_call.1} parent=47 // pred_fallthru
          _
        %s287 = sand.u32 %s44, 1
        %s288 = scalar_lea.sflag [#allocation3], %s287
        %s289 = sand.u32 %s44, 1
        %s290 = smul.addr %s289, 128
        %s291 = scalar_lea.vmem [#allocation2], %s290
        %p292 = pneg %p57
        %p293 = pneg %p54
        %p294 = pneg %p78
        %p295 = pneg %p75
        %p296 = pneg %p99
        %p297 = pneg %p96
        %p298 = pneg %p120
        %p299 = pneg %p117
        %p300 = pneg %p141
        %p301 = pneg %p138
        %p302 = pneg %p162
        %p303 = pneg %p159
        %p304 = pneg %p183
        %p305 = pneg %p180
        %p306 = pneg %p211
        %p307 = pneg %p208
        %s308 = sand.u32 %s198, 1
        %s309 = scalar_lea.sflag [#allocation4], %s308
        %s310 = sand.u32 %s198, 1
        %s311 = smul.addr %s310, 64
        %s312 = scalar_lea.vmem [#allocation5], %s311
        %s313 = smul.u32 8, %s29
        %s315 = smul.u32 %s29, 8
        %v316 = vld [vmem:[%s1] sm:$0xf]
        %v317 = vld [vmem:[%s1 + $0x4] sm:$0xf]
        %v318 = vld [vmem:[%s4] sm:$0x1]
        %v319 = vld [vmem:[%s5] sm:$0x1]
        %v320 = vld [vmem:[%s6] sm:$0x1]
        %s321 = smul.u32 %s315, 2
        %s322 = smul.addr %s321, 4
        %s323 = scalar_lea.vmem %s281, %s322 [#allocation2]
        %v324 = vld [vmem:[%s323] sm:$0xf]
        %v325 = vld [vmem:[%s323 + $0x4] sm:$0xf]
        %v326 = vld [vmem:[%s323 + $0x8] sm:$0xf]
        %v327 = vld [vmem:[%s323 + $0xc] sm:$0xf]
        %v328 = vld [vmem:[%s323 + $0x10] sm:$0xf]
        %v329 = vld [vmem:[%s323 + $0x14] sm:$0xf]
        %v330 = vld [vmem:[%s323 + $0x18] sm:$0xf]
        %v331 = vld [vmem:[%s323 + $0x1c] sm:$0xf]
        %v332 = vld [vmem:[%s323 + $0x20] sm:$0xf]
        %v333 = vld [vmem:[%s323 + $0x24] sm:$0xf]
        %v334 = vld [vmem:[%s323 + $0x28] sm:$0xf]
        %v335 = vld [vmem:[%s323 + $0x2c] sm:$0xf]
        %v336 = vld [vmem:[%s323 + $0x30] sm:$0xf]
        %v337 = vld [vmem:[%s323 + $0x34] sm:$0xf]
        %v338 = vld [vmem:[%s323 + $0x38] sm:$0xf]
        %v339 = vld [vmem:[%s323 + $0x3c] sm:$0xf]
        %v341 = vperm.slane %v318, 0
        %v359 = vunpack.c.l.b16 %v324
        %v360 = vunpack.c.l.b16 %v325
        %v361 = vunpack.c.l.b16 %v326
        %v362 = vunpack.c.l.b16 %v327
        %v363 = vunpack.c.l.b16 %v328
        %v364 = vunpack.c.l.b16 %v329
        %v365 = vunpack.c.l.b16 %v330
        %v366 = vunpack.c.l.b16 %v331
        %v367 = vunpack.c.l.b16 %v332
        %v368 = vunpack.c.l.b16 %v333
        %v369 = vunpack.c.l.b16 %v334
        %v370 = vunpack.c.l.b16 %v335
        %v371 = vunpack.c.l.b16 %v336
        %v372 = vunpack.c.l.b16 %v337
        %v373 = vunpack.c.l.b16 %v338
        %v374 = vunpack.c.l.b16 %v339
        %v375 = vpack.c.b16 %v360, %v359
        %v376 = vpack.c.b16 %v362, %v361
        %v377 = vpack.c.b16 %v364, %v363
        %v378 = vpack.c.b16 %v366, %v365
        %v379 = vpack.c.b16 %v368, %v367
        %v380 = vpack.c.b16 %v370, %v369
        %v381 = vpack.c.b16 %v372, %v371
        %v382 = vpack.c.b16 %v374, %v373
        %v385 = vunpack.c.l.b16 %v316
        %v386 = vunpack.c.l.b16 %v317
        %v387 = vpack.c.b16 %v386, %v385
        %vm389 = vcmask 130048
        %v391 = vsel %vm389, %v375, 0
        %v394 = vsel %vm389, %v376, 0
        %v397 = vsel %vm389, %v377, 0
        %v400 = vsel %vm389, %v378, 0
        %v403 = vsel %vm389, %v379, 0
        %v406 = vsel %vm389, %v380, 0
        %v409 = vsel %vm389, %v381, 0
        %v412 = vsel %vm389, %v382, 0
        %414 = vmatpush.bf16.msra.mxu0 0
        %415 = vmatpush.bf16.msra.mxu0 0
        %416 = vmatpush.bf16.msra.mxu0 0
        %417 = vmatpush.bf16.msra.mxu0 0
        %418 = vmatpush.bf16.msra.mxu0 0
        %419 = vmatpush.bf16.msra.mxu0 0
        %420 = vmatpush.bf16.msra.mxu0 0
        %421 = vmatpush.bf16.msra.mxu0 %v387
        %422 = vmatmul.bf16.gmra.mxu0 %v391
        %v423 = vpop.f32.mrf.mxu0
        %v424 = vadd.f32 %v341, %v423
        %v425 = vpop.f32.mrf.mxu0
        %v426 = vadd.f32 %v341, %v425
        %427 = vmatmul.bf16.gmra.mxu0 %v394
        %v428 = vpop.f32.mrf.mxu0
        %v429 = vadd.f32 %v341, %v428
        %v430 = vpop.f32.mrf.mxu0
        %v431 = vadd.f32 %v341, %v430
        %432 = vmatmul.bf16.gmra.mxu0 %v397
        %v433 = vpop.f32.mrf.mxu0
        %v434 = vadd.f32 %v341, %v433
        %v435 = vpop.f32.mrf.mxu0
        %v436 = vadd.f32 %v341, %v435
        %437 = vmatmul.bf16.gmra.mxu0 %v400
        %v438 = vpop.f32.mrf.mxu0
        %v439 = vadd.f32 %v341, %v438
        %v440 = vpop.f32.mrf.mxu0
        %v441 = vadd.f32 %v341, %v440
        %442 = vmatmul.bf16.gmra.mxu0 %v403
        %v443 = vpop.f32.mrf.mxu0
        %v444 = vadd.f32 %v341, %v443
        %v445 = vpop.f32.mrf.mxu0
        %v446 = vadd.f32 %v341, %v445
        %447 = vmatmul.bf16.gmra.mxu0 %v406
        %v448 = vpop.f32.mrf.mxu0
        %v449 = vadd.f32 %v341, %v448
        %v450 = vpop.f32.mrf.mxu0
        %v451 = vadd.f32 %v341, %v450
        %452 = vmatmul.bf16.gmra.mxu0 %v409
        %v453 = vpop.f32.mrf.mxu0
        %v454 = vadd.f32 %v341, %v453
        %v455 = vpop.f32.mrf.mxu0
        %v456 = vadd.f32 %v341, %v455
        %457 = vmatmul.bf16.gmra.mxu0 %v412
        %v458 = vpop.f32.mrf.mxu0
        %v459 = vadd.f32 %v341, %v458
        %v460 = vpop.f32.mrf.mxu0
        %v461 = vadd.f32 %v341, %v460
        %462 = vdwg.mxu0
        %v463 = vmax.f32 %v424, 0.0
        %v464 = vmax.f32 %v426, 0.0
        %v465 = vmax.f32 %v429, 0.0
        %v466 = vmax.f32 %v431, 0.0
        %v467 = vmax.f32 %v434, 0.0
        %v468 = vmax.f32 %v436, 0.0
        %v469 = vmax.f32 %v439, 0.0
        %v470 = vmax.f32 %v441, 0.0
        %v471 = vmax.f32 %v444, 0.0
        %v472 = vmax.f32 %v446, 0.0
        %v473 = vmax.f32 %v449, 0.0
        %v474 = vmax.f32 %v451, 0.0
        %v475 = vmax.f32 %v454, 0.0
        %v476 = vmax.f32 %v456, 0.0
        %v477 = vmax.f32 %v459, 0.0
        %v478 = vmax.f32 %v461, 0.0
        %v479 = vpack.c.bf16 %v463, %v463
        %v480 = vpack.c.bf16 %v464, %v464
        %v481 = vpack.c.bf16 %v465, %v465
        %v482 = vpack.c.bf16 %v466, %v466
        %v483 = vpack.c.bf16 %v467, %v467
        %v484 = vpack.c.bf16 %v468, %v468
        %v485 = vpack.c.bf16 %v469, %v469
        %v486 = vpack.c.bf16 %v470, %v470
        %v487 = vpack.c.bf16 %v471, %v471
        %v488 = vpack.c.bf16 %v472, %v472
        %v489 = vpack.c.bf16 %v473, %v473
        %v490 = vpack.c.bf16 %v474, %v474
        %v491 = vpack.c.bf16 %v475, %v475
        %v492 = vpack.c.bf16 %v476, %v476
        %v493 = vpack.c.bf16 %v477, %v477
        %v494 = vpack.c.bf16 %v478, %v478
        %s495 = ssub.s32 %s315, 1
        %p496 = scmp.gt.s32.totalorder %s495, 0
        %s497 = scalar_select %p496, %s495, 0
        %s498 = smul.u32 %s497, 2
        %s499 = smul.addr %s498, 4
        %s500 = scalar_lea.vmem %s281, %s499 [#allocation2]
        %v501 = vld [vmem:[%s500] sm:$0xf]
        %v502 = vld [vmem:[%s500 + $0x4] sm:$0xf]
        %s503 = sadd.s32 %s315, 8
        %p504 = scmp.lt.s32.totalorder %s503, 15
        %s505 = scalar_select %p504, %s503, 15
        %s506 = smul.u32 %s505, 2
        %s507 = smul.addr %s506, 4
        %s508 = scalar_lea.vmem %s281, %s507 [#allocation2]
        %v509 = vld [vmem:[%s508] sm:$0xf]
        %v510 = vld [vmem:[%s508 + $0x4] sm:$0xf]
        %v513 = vunpack.c.l.b16 %v501
        %v514 = vunpack.c.l.b16 %v502
        %v515 = vpack.c.b16 %v514, %v513
        %v518 = vunpack.c.l.b16 %v509
        %v519 = vunpack.c.l.b16 %v510
        %v520 = vpack.c.b16 %v519, %v518
        %v522 = vsel %vm389, %v515, 0
        %v525 = vsel %vm389, %v520, 0
        %527 = vmatpush.bf16.msra.mxu0 0
        %528 = vmatpush.bf16.msra.mxu0 0
        %529 = vmatpush.bf16.msra.mxu0 0
        %530 = vmatpush.bf16.msra.mxu0 0
        %531 = vmatpush.bf16.msra.mxu0 0
        %532 = vmatpush.bf16.msra.mxu0 0
        %533 = vmatpush.bf16.msra.mxu0 0
        %534 = vmatpush.bf16.msra.mxu0 %v387
        %535 = vmatmul.bf16.gmra.mxu0 %v522
        %v536 = vpop.f32.mrf.mxu0
        %v537 = vadd.f32 %v341, %v536
        %v538 = vpop.f32.mrf.mxu0
        %v539 = vadd.f32 %v341, %v538
        %540 = vmatmul.bf16.gmra.mxu0 %v525
        %v541 = vpop.f32.mrf.mxu0
        %v542 = vadd.f32 %v341, %v541
        %v543 = vpop.f32.mrf.mxu0
        %v544 = vadd.f32 %v341, %v543
        %545 = vdwg.mxu0
        %v546 = vmax.f32 %v537, 0.0
        %v547 = vmax.f32 %v539, 0.0
        %v548 = vmax.f32 %v542, 0.0
        %v549 = vmax.f32 %v544, 0.0
        %p550 = scmp.gt.s32.totalorder %s29, 0
        %s551 = scalar_select %p550, 1, 0
        %s552 = scvt.s32.f32 %s551
        %v553 = vstv %s552
        %v554 = vmul.f32 %v546, %v553
        %v555 = vmul.f32 %v547, %v553
        %v556 = vpack.c.bf16 %v554, %v554
        %v557 = vpack.c.bf16 %v555, %v555
        %p558 = scmp.lt.s32.totalorder %s29, 1
        %s559 = scalar_select %p558, 1, 0
        %s560 = scvt.s32.f32 %s559
        %v561 = vstv %s560
        %v562 = vmul.f32 %v548, %v561
        %v563 = vmul.f32 %v549, %v561
        %v564 = vpack.c.bf16 %v562, %v562
        %v565 = vpack.c.bf16 %v563, %v563
        %v586 = vunpack.c.l.b16 %v556
        %v587 = vunpack.c.l.b16 %v557
        %v588 = vunpack.c.l.b16 %v479
        %v589 = vunpack.c.l.b16 %v480
        %v590 = vunpack.c.l.b16 %v481
        %v591 = vunpack.c.l.b16 %v482
        %v592 = vunpack.c.l.b16 %v483
        %v593 = vunpack.c.l.b16 %v484
        %v594 = vunpack.c.l.b16 %v485
        %v595 = vunpack.c.l.b16 %v486
        %v596 = vunpack.c.l.b16 %v487
        %v597 = vunpack.c.l.b16 %v488
        %v598 = vunpack.c.l.b16 %v489
        %v599 = vunpack.c.l.b16 %v490
        %v600 = vunpack.c.l.b16 %v491
        %v601 = vunpack.c.l.b16 %v492
        %v602 = vunpack.c.l.b16 %v493
        %v603 = vunpack.c.l.b16 %v494
        %v604 = vunpack.c.l.b16 %v564
        %v605 = vunpack.c.l.b16 %v565
        %v606 = vpack.c.b16 %v587, %v586
        %v607 = vpack.c.b16 %v589, %v588
        %v608 = vpack.c.b16 %v591, %v590
        %v609 = vpack.c.b16 %v593, %v592
        %v610 = vpack.c.b16 %v595, %v594
        %v611 = vpack.c.b16 %v597, %v596
        %v612 = vpack.c.b16 %v599, %v598
        %v613 = vpack.c.b16 %v601, %v600
        %v614 = vpack.c.b16 %v603, %v602
        %v615 = vpack.c.b16 %v605, %v604
        %v617 = vshrl.u32 %v606, 16
        %v619 = vrot.slane %v617, 7
        %v620 = vshll.u32 %v606, 16
        %v622 = vor.u32 %v619, %v620
        %v624 = vshrl.u32 %v607, 16
        %v626 = vrot.slane %v624, 7
        %v627 = vshll.u32 %v607, 16
        %v629 = vor.u32 %v626, %v627
        %v631 = vshrl.u32 %v608, 16
        %v633 = vrot.slane %v631, 7
        %v634 = vshll.u32 %v608, 16
        %v636 = vor.u32 %v633, %v634
        %v638 = vshrl.u32 %v609, 16
        %v640 = vrot.slane %v638, 7
        %v641 = vshll.u32 %v609, 16
        %v643 = vor.u32 %v640, %v641
        %v645 = vshrl.u32 %v610, 16
        %v647 = vrot.slane %v645, 7
        %v648 = vshll.u32 %v610, 16
        %v650 = vor.u32 %v647, %v648
        %v652 = vshrl.u32 %v611, 16
        %v654 = vrot.slane %v652, 7
        %v655 = vshll.u32 %v611, 16
        %v657 = vor.u32 %v654, %v655
        %v659 = vshrl.u32 %v612, 16
        %v661 = vrot.slane %v659, 7
        %v662 = vshll.u32 %v612, 16
        %v664 = vor.u32 %v661, %v662
        %v666 = vshrl.u32 %v613, 16
        %v668 = vrot.slane %v666, 7
        %v669 = vshll.u32 %v613, 16
        %v671 = vor.u32 %v668, %v669
        %v673 = vshrl.u32 %v614, 16
        %v675 = vrot.slane %v673, 7
        %v676 = vshll.u32 %v614, 16
        %v678 = vor.u32 %v675, %v676
        %v680 = vshrl.u32 %v615, 16
        %v682 = vrot.slane %v680, 7
        %v683 = vshll.u32 %v615, 16
        %v685 = vor.u32 %v682, %v683
        %vm696 = vcmask 1040384
        %vm697 = vsmask.f32 256
        %vm698 = vmand %vm696, %vm697
        %v699 = vsel %vm698, 0, %v622
        %v700 = vsel %vm698, 0, %v629
        %v701 = vsel %vm698, 0, %v636
        %v702 = vsel %vm698, 0, %v643
        %v703 = vsel %vm698, 0, %v650
        %v704 = vsel %vm698, 0, %v657
        %v705 = vsel %vm698, 0, %v664
        %v706 = vsel %vm698, 0, %v671
        %v707 = vsel %vm698, 0, %v678
        %v708 = vsel %vm698, 0, %v685
        %v709 = vrot.slane %v620, 1
        %v710 = vor.u32 %v617, %v709
        %v711 = vrot.slane %v627, 1
        %v712 = vor.u32 %v624, %v711
        %v713 = vrot.slane %v634, 1
        %v714 = vor.u32 %v631, %v713
        %v715 = vrot.slane %v641, 1
        %v716 = vor.u32 %v638, %v715
        %v717 = vrot.slane %v648, 1
        %v718 = vor.u32 %v645, %v717
        %v719 = vrot.slane %v655, 1
        %v720 = vor.u32 %v652, %v719
        %v721 = vrot.slane %v662, 1
        %v722 = vor.u32 %v659, %v721
        %v723 = vrot.slane %v669, 1
        %v724 = vor.u32 %v666, %v723
        %v725 = vrot.slane %v676, 1
        %v726 = vor.u32 %v673, %v725
        %v727 = vrot.slane %v683, 1
        %v728 = vor.u32 %v680, %v727
        %vm739 = vcmask 1047552
        %vm740 = vsmask.f32 7424
        %vm741 = vmand %vm739, %vm740
        %v742 = vsel %vm741, %v710, 0
        %v743 = vsel %vm741, %v712, 0
        %v744 = vsel %vm741, %v714, 0
        %v745 = vsel %vm741, %v716, 0
        %v746 = vsel %vm741, %v718, 0
        %v747 = vsel %vm741, %v720, 0
        %v748 = vsel %vm741, %v722, 0
        %v749 = vsel %vm741, %v724, 0
        %v750 = vsel %vm741, %v726, 0
        %v751 = vsel %vm741, %v728, 0
        %752 = vrot.lane.b32.xlu0 %v606, 4
        %v753 = vpop.permute.xlu0 %752
        %754 = vrot.lane.b32.xlu0 %v607, 4
        %v755 = vpop.permute.xlu0 %754
        %756 = vrot.lane.b32.xlu0 %v608, 4
        %v757 = vpop.permute.xlu0 %756
        %758 = vrot.lane.b32.xlu0 %v609, 4
        %v759 = vpop.permute.xlu0 %758
        %760 = vrot.lane.b32.xlu0 %v610, 4
        %v761 = vpop.permute.xlu0 %760
        %762 = vrot.lane.b32.xlu0 %v611, 4
        %v763 = vpop.permute.xlu0 %762
        %764 = vrot.lane.b32.xlu0 %v612, 4
        %v765 = vpop.permute.xlu0 %764
        %766 = vrot.lane.b32.xlu0 %v613, 4
        %v767 = vpop.permute.xlu0 %766
        %768 = vrot.lane.b32.xlu0 %v614, 4
        %v769 = vpop.permute.xlu0 %768
        %770 = vrot.lane.b32.xlu0 %v615, 4
        %v771 = vpop.permute.xlu0 %770
        %782 = vrot.lane.b32.xlu0 %v742, 8
        %v783 = vpop.permute.xlu0 %782
        %784 = vrot.lane.b32.xlu0 %v743, 8
        %v785 = vpop.permute.xlu0 %784
        %786 = vrot.lane.b32.xlu0 %v744, 8
        %v787 = vpop.permute.xlu0 %786
        %788 = vrot.lane.b32.xlu0 %v745, 8
        %v789 = vpop.permute.xlu0 %788
        %790 = vrot.lane.b32.xlu0 %v746, 8
        %v791 = vpop.permute.xlu0 %790
        %792 = vrot.lane.b32.xlu0 %v747, 8
        %v793 = vpop.permute.xlu0 %792
        %794 = vrot.lane.b32.xlu0 %v748, 8
        %v795 = vpop.permute.xlu0 %794
        %796 = vrot.lane.b32.xlu0 %v749, 8
        %v797 = vpop.permute.xlu0 %796
        %798 = vrot.lane.b32.xlu0 %v750, 8
        %v799 = vpop.permute.xlu0 %798
        %800 = vrot.lane.b32.xlu0 %v751, 8
        %v801 = vpop.permute.xlu0 %800
        %vm802 = vcmask 31744
        %v805 = vsel %vm802, %v699, %v753
        %v808 = vsel %vm802, %v700, %v755
        %v811 = vsel %vm802, %v701, %v757
        %v814 = vsel %vm802, %v702, %v759
        %v817 = vsel %vm802, %v703, %v761
        %v820 = vsel %vm802, %v704, %v763
        %v823 = vsel %vm802, %v705, %v765
        %v826 = vsel %vm802, %v706, %v767
        %v829 = vsel %vm802, %v707, %v769
        %v832 = vsel %vm802, %v708, %v771
        %vm833 = vcmask 64512
        %v835 = vsel %vm833, %v805, %v783
        %v837 = vsel %vm833, %v808, %v785
        %v839 = vsel %vm833, %v811, %v787
        %v841 = vsel %vm833, %v814, %v789
        %v843 = vsel %vm833, %v817, %v791
        %v845 = vsel %vm833, %v820, %v793
        %v847 = vsel %vm833, %v823, %v795
        %v849 = vsel %vm833, %v826, %v797
        %v851 = vsel %vm833, %v829, %v799
        %v853 = vsel %vm833, %v832, %v801
        %v854 = vld [vmem:[%s2] sm:$0xf]
        %v855 = vld [vmem:[%s2 + $0x4] sm:$0x3]
        %s856 = scalar_lea.vmem %s2, 8
        %v857 = vld [vmem:[%s856] sm:$0xf]
        %v858 = vld [vmem:[%s856 + $0x4] sm:$0x3]
        %v861 = vunpack.c.l.b16 %v857
        %v862 = vunpack.c.l.b16 %v858
        %v863 = vpack.c.b16 %v862, %v861
        %vm864 = vcmask 97280
        %v865 = vsel %vm864, %v837, 0
        %v867 = vsel %vm864, %v839, 0
        %v869 = vsel %vm864, %v841, 0
        %v871 = vsel %vm864, %v843, 0
        %v873 = vsel %vm864, %v845, 0
        %v875 = vsel %vm864, %v847, 0
        %v877 = vsel %vm864, %v849, 0
        %v879 = vsel %vm864, %v851, 0
        %vm881 = vcmask 1045504
        %v883 = vsel %vm881, %v863, 0
        %885 = vmatpush.bf16.msra.mxu0 0
        %886 = vmatpush.bf16.msra.mxu0 0
        %887 = vmatpush.bf16.msra.mxu0 0
        %888 = vmatpush.bf16.msra.mxu0 0
        %889 = vmatpush.bf16.msra.mxu0 0
        %890 = vmatpush.bf16.msra.mxu0 0
        %891 = vmatpush.bf16.msra.mxu0 0
        %892 = vmatpush.bf16.msra.mxu0 %v883
        %893 = vmatmul.bf16.gmra.mxu0 %v865
        %v894 = vpop.f32.mrf.mxu0
        %v895 = vadd.f32 0.0, %v894
        %v896 = vpop.f32.mrf.mxu0
        %v897 = vadd.f32 0.0, %v896
        %898 = vmatmul.bf16.gmra.mxu0 %v867
        %v899 = vpop.f32.mrf.mxu0
        %v900 = vadd.f32 0.0, %v899
        %v901 = vpop.f32.mrf.mxu0
        %v902 = vadd.f32 0.0, %v901
        %903 = vmatmul.bf16.gmra.mxu0 %v869
        %v904 = vpop.f32.mrf.mxu0
        %v905 = vadd.f32 0.0, %v904
        %v906 = vpop.f32.mrf.mxu0
        %v907 = vadd.f32 0.0, %v906
        %908 = vmatmul.bf16.gmra.mxu0 %v871
        %v909 = vpop.f32.mrf.mxu0
        %v910 = vadd.f32 0.0, %v909
        %v911 = vpop.f32.mrf.mxu0
        %v912 = vadd.f32 0.0, %v911
        %913 = vmatmul.bf16.gmra.mxu0 %v873
        %v914 = vpop.f32.mrf.mxu0
        %v915 = vadd.f32 0.0, %v914
        %v916 = vpop.f32.mrf.mxu0
        %v917 = vadd.f32 0.0, %v916
        %918 = vmatmul.bf16.gmra.mxu0 %v875
        %v919 = vpop.f32.mrf.mxu0
        %v920 = vadd.f32 0.0, %v919
        %v921 = vpop.f32.mrf.mxu0
        %v922 = vadd.f32 0.0, %v921
        %923 = vmatmul.bf16.gmra.mxu0 %v877
        %v924 = vpop.f32.mrf.mxu0
        %v925 = vadd.f32 0.0, %v924
        %v926 = vpop.f32.mrf.mxu0
        %v927 = vadd.f32 0.0, %v926
        %928 = vmatmul.bf16.gmra.mxu0 %v879
        %v929 = vpop.f32.mrf.mxu0
        %v930 = vadd.f32 0.0, %v929
        %v931 = vpop.f32.mrf.mxu0
        %v932 = vadd.f32 0.0, %v931
        %933 = vdwg.mxu0
        %v936 = vunpack.c.l.b16 %v854
        %v937 = vunpack.c.l.b16 %v855
        %v938 = vpack.c.b16 %v937, %v936
        %v939 = vsel %vm864, %v835, 0
        %v942 = vsel %vm881, %v938, 0
        %944 = vmatpush.bf16.msra.mxu0 0
        %945 = vmatpush.bf16.msra.mxu0 0
        %946 = vmatpush.bf16.msra.mxu0 0
        %947 = vmatpush.bf16.msra.mxu0 0
        %948 = vmatpush.bf16.msra.mxu0 0
        %949 = vmatpush.bf16.msra.mxu0 0
        %950 = vmatpush.bf16.msra.mxu0 0
        %951 = vmatpush.bf16.msra.mxu0 %v942
        %952 = vmatmul.bf16.gmra.mxu0 %v939
        %v953 = vpop.f32.mrf.mxu0
        %v954 = vadd.f32 %v895, %v953
        %v955 = vpop.f32.mrf.mxu0
        %v956 = vadd.f32 %v897, %v955
        %957 = vmatmul.bf16.gmra.mxu0 %v865
        %v958 = vpop.f32.mrf.mxu0
        %v959 = vadd.f32 %v900, %v958
        %v960 = vpop.f32.mrf.mxu0
        %v961 = vadd.f32 %v902, %v960
        %962 = vmatmul.bf16.gmra.mxu0 %v867
        %v963 = vpop.f32.mrf.mxu0
        %v964 = vadd.f32 %v905, %v963
        %v965 = vpop.f32.mrf.mxu0
        %v966 = vadd.f32 %v907, %v965
        %967 = vmatmul.bf16.gmra.mxu0 %v869
        %v968 = vpop.f32.mrf.mxu0
        %v969 = vadd.f32 %v910, %v968
        %v970 = vpop.f32.mrf.mxu0
        %v971 = vadd.f32 %v912, %v970
        %972 = vmatmul.bf16.gmra.mxu0 %v871
        %v973 = vpop.f32.mrf.mxu0
        %v974 = vadd.f32 %v915, %v973
        %v975 = vpop.f32.mrf.mxu0
        %v976 = vadd.f32 %v917, %v975
        %977 = vmatmul.bf16.gmra.mxu0 %v873
        %v978 = vpop.f32.mrf.mxu0
        %v979 = vadd.f32 %v920, %v978
        %v980 = vpop.f32.mrf.mxu0
        %v981 = vadd.f32 %v922, %v980
        %982 = vmatmul.bf16.gmra.mxu0 %v875
        %v983 = vpop.f32.mrf.mxu0
        %v984 = vadd.f32 %v925, %v983
        %v985 = vpop.f32.mrf.mxu0
        %v986 = vadd.f32 %v927, %v985
        %987 = vmatmul.bf16.gmra.mxu0 %v877
        %v988 = vpop.f32.mrf.mxu0
        %v989 = vadd.f32 %v930, %v988
        %v990 = vpop.f32.mrf.mxu0
        %v991 = vadd.f32 %v932, %v990
        %992 = vdwg.mxu0
        %s993 = scalar_lea.vmem %s2, 16
        %v994 = vld [vmem:[%s993] sm:$0xf]
        %v995 = vld [vmem:[%s993 + $0x4] sm:$0x3]
        %v998 = vunpack.c.l.b16 %v994
        %v999 = vunpack.c.l.b16 %v995
        %v1000 = vpack.c.b16 %v999, %v998
        %v1001 = vsel %vm864, %v853, 0
        %v1004 = vsel %vm881, %v1000, 0
        %1006 = vmatpush.bf16.msra.mxu0 0
        %1007 = vmatpush.bf16.msra.mxu0 0
        %1008 = vmatpush.bf16.msra.mxu0 0
        %1009 = vmatpush.bf16.msra.mxu0 0
        %1010 = vmatpush.bf16.msra.mxu0 0
        %1011 = vmatpush.bf16.msra.mxu0 0
        %1012 = vmatpush.bf16.msra.mxu0 0
        %1013 = vmatpush.bf16.msra.mxu0 %v1004
        %1014 = vmatmul.bf16.gmra.mxu0 %v867
        %v1015 = vpop.f32.mrf.mxu0
        %v1016 = vadd.f32 0.0, %v1015
        %v1017 = vpop.f32.mrf.mxu0
        %v1018 = vadd.f32 0.0, %v1017
        %1019 = vmatmul.bf16.gmra.mxu0 %v869
        %v1020 = vpop.f32.mrf.mxu0
        %v1021 = vadd.f32 0.0, %v1020
        %v1022 = vpop.f32.mrf.mxu0
        %v1023 = vadd.f32 0.0, %v1022
        %1024 = vmatmul.bf16.gmra.mxu0 %v871
        %v1025 = vpop.f32.mrf.mxu0
        %v1026 = vadd.f32 0.0, %v1025
        %v1027 = vpop.f32.mrf.mxu0
        %v1028 = vadd.f32 0.0, %v1027
        %1029 = vmatmul.bf16.gmra.mxu0 %v873
        %v1030 = vpop.f32.mrf.mxu0
        %v1031 = vadd.f32 0.0, %v1030
        %v1032 = vpop.f32.mrf.mxu0
        %v1033 = vadd.f32 0.0, %v1032
        %1034 = vmatmul.bf16.gmra.mxu0 %v875
        %v1035 = vpop.f32.mrf.mxu0
        %v1036 = vadd.f32 0.0, %v1035
        %v1037 = vpop.f32.mrf.mxu0
        %v1038 = vadd.f32 0.0, %v1037
        %1039 = vmatmul.bf16.gmra.mxu0 %v877
        %v1040 = vpop.f32.mrf.mxu0
        %v1041 = vadd.f32 0.0, %v1040
        %v1042 = vpop.f32.mrf.mxu0
        %v1043 = vadd.f32 0.0, %v1042
        %1044 = vmatmul.bf16.gmra.mxu0 %v879
        %v1045 = vpop.f32.mrf.mxu0
        %v1046 = vadd.f32 0.0, %v1045
        %v1047 = vpop.f32.mrf.mxu0
        %v1048 = vadd.f32 0.0, %v1047
        %1049 = vmatmul.bf16.gmra.mxu0 %v1001
        %v1050 = vpop.f32.mrf.mxu0
        %v1051 = vadd.f32 0.0, %v1050
        %v1052 = vpop.f32.mrf.mxu0
        %v1053 = vadd.f32 0.0, %v1052
        %1054 = vdwg.mxu0
        %v1055 = vadd.f32 %v954, %v1016
        %v1056 = vadd.f32 %v956, %v1018
        %v1057 = vadd.f32 %v959, %v1021
        %v1058 = vadd.f32 %v961, %v1023
        %v1059 = vadd.f32 %v964, %v1026
        %v1060 = vadd.f32 %v966, %v1028
        %v1061 = vadd.f32 %v969, %v1031
        %v1062 = vadd.f32 %v971, %v1033
        %v1063 = vadd.f32 %v974, %v1036
        %v1064 = vadd.f32 %v976, %v1038
        %v1065 = vadd.f32 %v979, %v1041
        %v1066 = vadd.f32 %v981, %v1043
        %v1067 = vadd.f32 %v984, %v1046
        %v1068 = vadd.f32 %v986, %v1048
        %v1069 = vadd.f32 %v989, %v1051
        %v1070 = vadd.f32 %v991, %v1053
        %v1072 = vperm.slane %v319, 0
        %v1074 = vadd.f32 %v1055, %v1072
        %v1075 = vadd.f32 %v1056, %v1072
        %v1076 = vadd.f32 %v1057, %v1072
        %v1077 = vadd.f32 %v1058, %v1072
        %v1078 = vadd.f32 %v1059, %v1072
        %v1079 = vadd.f32 %v1060, %v1072
        %v1080 = vadd.f32 %v1061, %v1072
        %v1081 = vadd.f32 %v1062, %v1072
        %v1082 = vadd.f32 %v1063, %v1072
        %v1083 = vadd.f32 %v1064, %v1072
        %v1084 = vadd.f32 %v1065, %v1072
        %v1085 = vadd.f32 %v1066, %v1072
        %v1086 = vadd.f32 %v1067, %v1072
        %v1087 = vadd.f32 %v1068, %v1072
        %v1088 = vadd.f32 %v1069, %v1072
        %v1089 = vadd.f32 %v1070, %v1072
        %v1090 = vmax.f32 %v1074, 0.0
        %v1091 = vmax.f32 %v1075, 0.0
        %v1092 = vmax.f32 %v1076, 0.0
        %v1093 = vmax.f32 %v1077, 0.0
        %v1094 = vmax.f32 %v1078, 0.0
        %v1095 = vmax.f32 %v1079, 0.0
        %v1096 = vmax.f32 %v1080, 0.0
        %v1097 = vmax.f32 %v1081, 0.0
        %v1098 = vmax.f32 %v1082, 0.0
        %v1099 = vmax.f32 %v1083, 0.0
        %v1100 = vmax.f32 %v1084, 0.0
        %v1101 = vmax.f32 %v1085, 0.0
        %v1102 = vmax.f32 %v1086, 0.0
        %v1103 = vmax.f32 %v1087, 0.0
        %v1104 = vmax.f32 %v1088, 0.0
        %v1105 = vmax.f32 %v1089, 0.0
        %v1106 = vpack.c.bf16 %v1091, %v1090
        %v1107 = vpack.c.bf16 %v1093, %v1092
        %v1108 = vpack.c.bf16 %v1095, %v1094
        %v1109 = vpack.c.bf16 %v1097, %v1096
        %v1110 = vpack.c.bf16 %v1099, %v1098
        %v1111 = vpack.c.bf16 %v1101, %v1100
        %v1112 = vpack.c.bf16 %v1103, %v1102
        %v1113 = vpack.c.bf16 %v1105, %v1104
        %v1114 = vld [vmem:[%s3] sm:$0x3]
        %v1116 = vperm.slane %v320, 0
        %v1119 = vsel %vm802, %v1106, 0
        %v1122 = vsel %vm802, %v1107, 0
        %v1125 = vsel %vm802, %v1108, 0
        %v1128 = vsel %vm802, %v1109, 0
        %v1131 = vsel %vm802, %v1110, 0
        %v1134 = vsel %vm802, %v1111, 0
        %v1137 = vsel %vm802, %v1112, 0
        %v1140 = vsel %vm802, %v1113, 0
        %vm1142 = vcmask 1041408
        %v1144 = vsel %vm1142, %v1114, 0
        %1146 = vmatpush.bf16.msra.mxu0 0
        %1147 = vmatpush.bf16.msra.mxu0 0
        %1148 = vmatpush.bf16.msra.mxu0 0
        %1149 = vmatpush.bf16.msra.mxu0 0
        %1150 = vmatpush.bf16.msra.mxu0 0
        %1151 = vmatpush.bf16.msra.mxu0 0
        %1152 = vmatpush.bf16.msra.mxu0 0
        %1153 = vmatpush.bf16.msra.mxu0 %v1144
        %1154 = vmatmul.bf16.gmra.mxu0 %v1119
        %v1155 = vpop.f32.mrf.mxu0
        %v1156 = vadd.f32 %v1116, %v1155
        %v1157 = vpop.f32.mrf.mxu0
        %v1158 = vadd.f32 %v1116, %v1157
        %1159 = vmatmul.bf16.gmra.mxu0 %v1122
        %v1160 = vpop.f32.mrf.mxu0
        %v1161 = vadd.f32 %v1116, %v1160
        %v1162 = vpop.f32.mrf.mxu0
        %v1163 = vadd.f32 %v1116, %v1162
        %1164 = vmatmul.bf16.gmra.mxu0 %v1125
        %v1165 = vpop.f32.mrf.mxu0
        %v1166 = vadd.f32 %v1116, %v1165
        %v1167 = vpop.f32.mrf.mxu0
        %v1168 = vadd.f32 %v1116, %v1167
        %1169 = vmatmul.bf16.gmra.mxu0 %v1128
        %v1170 = vpop.f32.mrf.mxu0
        %v1171 = vadd.f32 %v1116, %v1170
        %v1172 = vpop.f32.mrf.mxu0
        %v1173 = vadd.f32 %v1116, %v1172
        %1174 = vmatmul.bf16.gmra.mxu0 %v1131
        %v1175 = vpop.f32.mrf.mxu0
        %v1176 = vadd.f32 %v1116, %v1175
        %v1177 = vpop.f32.mrf.mxu0
        %v1178 = vadd.f32 %v1116, %v1177
        %1179 = vmatmul.bf16.gmra.mxu0 %v1134
        %v1180 = vpop.f32.mrf.mxu0
        %v1181 = vadd.f32 %v1116, %v1180
        %v1182 = vpop.f32.mrf.mxu0
        %v1183 = vadd.f32 %v1116, %v1182
        %1184 = vmatmul.bf16.gmra.mxu0 %v1137
        %v1185 = vpop.f32.mrf.mxu0
        %v1186 = vadd.f32 %v1116, %v1185
        %v1187 = vpop.f32.mrf.mxu0
        %v1188 = vadd.f32 %v1116, %v1187
        %1189 = vmatmul.bf16.gmra.mxu0 %v1140
        %v1190 = vpop.f32.mrf.mxu0
        %v1191 = vadd.f32 %v1116, %v1190
        %v1192 = vpop.f32.mrf.mxu0
        %v1193 = vadd.f32 %v1116, %v1192
        %1194 = vdwg.mxu0
        %v1195 = vunpack.c.l.bf16 %v324
        %v1196 = vunpack.c.l.bf16 %v325
        %v1197 = vunpack.c.l.bf16 %v326
        %v1198 = vunpack.c.l.bf16 %v327
        %v1199 = vunpack.c.l.bf16 %v328
        %v1200 = vunpack.c.l.bf16 %v329
        %v1201 = vunpack.c.l.bf16 %v330
        %v1202 = vunpack.c.l.bf16 %v331
        %v1203 = vunpack.c.l.bf16 %v332
        %v1204 = vunpack.c.l.bf16 %v333
        %v1205 = vunpack.c.l.bf16 %v334
        %v1206 = vunpack.c.l.bf16 %v335
        %v1207 = vunpack.c.l.bf16 %v336
        %v1208 = vunpack.c.l.bf16 %v337
        %v1209 = vunpack.c.l.bf16 %v338
        %v1210 = vunpack.c.l.bf16 %v339
        %v1211 = vadd.f32 %v1156, %v1195
        %v1212 = vadd.f32 %v1158, %v1196
        %v1213 = vadd.f32 %v1161, %v1197
        %v1214 = vadd.f32 %v1163, %v1198
        %v1215 = vadd.f32 %v1166, %v1199
        %v1216 = vadd.f32 %v1168, %v1200
        %v1217 = vadd.f32 %v1171, %v1201
        %v1218 = vadd.f32 %v1173, %v1202
        %v1219 = vadd.f32 %v1176, %v1203
        %v1220 = vadd.f32 %v1178, %v1204
        %v1221 = vadd.f32 %v1181, %v1205
        %v1222 = vadd.f32 %v1183, %v1206
        %v1223 = vadd.f32 %v1186, %v1207
        %v1224 = vadd.f32 %v1188, %v1208
        %v1225 = vadd.f32 %v1191, %v1209
        %v1226 = vadd.f32 %v1193, %v1210
        %v1227 = vmax.f32 %v1211, 0.0
        %v1228 = vmax.f32 %v1212, 0.0
        %v1229 = vmax.f32 %v1213, 0.0
        %v1230 = vmax.f32 %v1214, 0.0
        %v1231 = vmax.f32 %v1215, 0.0
        %v1232 = vmax.f32 %v1216, 0.0
        %v1233 = vmax.f32 %v1217, 0.0
        %v1234 = vmax.f32 %v1218, 0.0
        %v1235 = vmax.f32 %v1219, 0.0
        %v1236 = vmax.f32 %v1220, 0.0
        %v1237 = vmax.f32 %v1221, 0.0
        %v1238 = vmax.f32 %v1222, 0.0
        %v1239 = vmax.f32 %v1223, 0.0
        %v1240 = vmax.f32 %v1224, 0.0
        %v1241 = vmax.f32 %v1225, 0.0
        %v1242 = vmax.f32 %v1226, 0.0
        %v1243 = vpack.c.bf16 %v1227, %v1227
        %v1244 = vpack.c.bf16 %v1228, %v1228
        %v1245 = vpack.c.bf16 %v1229, %v1229
        %v1246 = vpack.c.bf16 %v1230, %v1230
        %v1247 = vpack.c.bf16 %v1231, %v1231
        %v1248 = vpack.c.bf16 %v1232, %v1232
        %v1249 = vpack.c.bf16 %v1233, %v1233
        %v1250 = vpack.c.bf16 %v1234, %v1234
        %v1251 = vpack.c.bf16 %v1235, %v1235
        %v1252 = vpack.c.bf16 %v1236, %v1236
        %v1253 = vpack.c.bf16 %v1237, %v1237
        %v1254 = vpack.c.bf16 %v1238, %v1238
        %v1255 = vpack.c.bf16 %v1239, %v1239
        %v1256 = vpack.c.bf16 %v1240, %v1240
        %v1257 = vpack.c.bf16 %v1241, %v1241
        %v1258 = vpack.c.bf16 %v1242, %v1242
        %vm1259 = vcmask 125952
        %1260 = vst.msk [vmem:[%s312] sm:$0xf] %vm1259, %v1243
        %1261 = vst.msk [vmem:[%s312 + $0x4] sm:$0xf] %vm1259, %v1244
        %1262 = vst.msk [vmem:[%s312 + $0x8] sm:$0xf] %vm1259, %v1245
        %1263 = vst.msk [vmem:[%s312 + $0xc] sm:$0xf] %vm1259, %v1246
        %1264 = vst.msk [vmem:[%s312 + $0x10] sm:$0xf] %vm1259, %v1247
        %1265 = vst.msk [vmem:[%s312 + $0x14] sm:$0xf] %vm1259, %v1248
        %1266 = vst.msk [vmem:[%s312 + $0x18] sm:$0xf] %vm1259, %v1249
        %1267 = vst.msk [vmem:[%s312 + $0x1c] sm:$0xf] %vm1259, %v1250
        %1268 = vst.msk [vmem:[%s312 + $0x20] sm:$0xf] %vm1259, %v1251
        %1269 = vst.msk [vmem:[%s312 + $0x24] sm:$0xf] %vm1259, %v1252
        %1270 = vst.msk [vmem:[%s312 + $0x28] sm:$0xf] %vm1259, %v1253
        %1271 = vst.msk [vmem:[%s312 + $0x2c] sm:$0xf] %vm1259, %v1254
        %1272 = vst.msk [vmem:[%s312 + $0x30] sm:$0xf] %vm1259, %v1255
        %1273 = vst.msk [vmem:[%s312 + $0x34] sm:$0xf] %vm1259, %v1256
        %1274 = vst.msk [vmem:[%s312 + $0x38] sm:$0xf] %vm1259, %v1257
        %1275 = vst.msk [vmem:[%s312 + $0x3c] sm:$0xf] %vm1259, %v1258
        %s1276 = sand.u32 %s198, 1
        %s1277 = scalar_lea.sflag [#allocation4], %s1276
        %s1278 = sand.u32 %s198, 1
        %s1279 = smul.addr %s1278, 64
        %s1280 = scalar_lea.vmem [#allocation5], %s1279
        // Predicated region
        $region53: #{tpu_custom_call.1} parent=47 // pred_check
          %p1281 = pneg %p208
        $region54: #{tpu_custom_call.1} parent=47 // pred_check_branch
          %1283 = sbr.rel (%p1281) target = $region56
        $region55: #{tpu_custom_call.1} parent=47 // pred_region
          %s1284 = smul.u32 8, %s29
          %1286 = vsyncadd %s1277, 0
          %s1287 = smul.addr %s1284, 2
          %s1288 = smul.addr %s28, 32
          %s1289 = sadd.s32 %s1287, %s1288
          %s1290 = smul.addr %s1289, 4
          %s1291 = scalar_lea.hbm %s7, %s1290
          %s1292 = sshll.u32 %s1280, 4
          %s1293 = int_to_ptr.vmem [resolvable:$true] %s1292
          %s1294 = sshll.u32 %s1291, 4
          %s1295 = int_to_ptr.hbm [resolvable:$true] %s1294
          %1300 = dma.vmem_to_hbm [thread:$0]  %s1293, 1024, %s1295, %s1277, 64, 64, 4
        $region56: #{tpu_custom_call.1} parent=47 // pred_fallthru
          _
      $region48: #{tpu_custom_call.1} parent=5 // pred_fallthru
        _
      %p1301 = scmp.le.s32.totalorder 2, %s19
      // Predicated region
      $region57: #{tpu_custom_call.1} parent=5 // pred_check
        %p1302 = pneg %p1301
      $region58: #{tpu_custom_call.1} parent=5 // pred_check_branch
        %1304 = sbr.rel (%p1302) target = $region60
      $region59: #{tpu_custom_call.1} parent=5 // pred_region
        %s1305 = ssub.s32 %s19, 2
        // Predicated region
        $region61: #{tpu_custom_call.1} parent=59 // pred_check
          %p1306 = pneg %p214
        $region62: #{tpu_custom_call.1} parent=59 // pred_check_branch
          %1308 = sbr.rel (%p1306) target = $region64
        $region63: #{tpu_custom_call.1} parent=59 // pred_region
          %s1309 = sand.u32 %s199, 1
          %s1310 = scalar_lea.sflag [#allocation4], %s1309
          %s1311 = sand.u32 %s199, 1
          %s1312 = smul.addr %s1311, 64
          %s1313 = scalar_lea.vmem [#allocation5], %s1312
          %1315 = dma.done %s1310, 1024
        $region64: #{tpu_custom_call.1} parent=59 // pred_fallthru
          _
      $region60: #{tpu_custom_call.1} parent=5 // pred_fallthru
        _
    $region6: #{tpu_custom_call.1} parent=1 // loop_footer
      %s23 = sadd.s32 1, %s19
    $region7: #{tpu_custom_call.1} parent=1 // loop_footer_branch
      %18 = sbr.rel target = $region3
    $region8: #{tpu_custom_call.1} parent=1 // loop_exit
      _
    %1316 = vsyncpa [#allocation3], 1
    %s1317 = scalar_lea.sflag [#allocation3], 1
    %1318 = vsyncpa %s1317, 1
    %1319 = vsyncpa [#allocation4], 1
    %s1320 = scalar_lea.sflag [#allocation4], 1
    %1321 = vsyncpa %s1320, 1

</llo_original>
